<compile_context>
chip_gen: v6e
topology: v6e:2x2x1
jax: 0.10.0
libtpu: 0.0.40
codegen_flags: <defaults>
</compile_context>

<pallas_src>
import functools
import math

import jax
import jax.numpy as jnp
from jax.experimental import pallas as pl
from jax.experimental.pallas import tpu as pltpu


_FAST_PATH_BYTES = 4 * 1024 * 1024      # single-block path for <= 4 MiB inputs


def _round_up(x, m):
    return ((x + m - 1) // m) * m


def _sublane_min(itemsize):
    # minimal sublane tile per element width (f32:8, bf16:16, int8/fp8:32)
    return {4: 8, 2: 16, 1: 32}.get(itemsize, 8)


def _tpu_params():
    """(vmem_capacity_bytes, dual_core) with conservative fallbacks."""
    vmem_cap = 128 * 1024 * 1024
    dual_core = False
    try:
        info = pltpu.get_tpu_info()
        cap = getattr(info, "vmem_capacity_bytes", None)
        if cap:
            vmem_cap = int(cap)
        cores = None
        for name in ("num_tensorcores", "tensorcores_per_chip",
                     "num_cores", "cores_per_chip"):
            val = getattr(info, name, None)
            if val is not None:
                cores = int(val)
                break
        if cores is not None:
            dual_core = cores > 1
        else:
            # Heuristic: dual-TC chips (v7x) expose 64 MiB VMEM per TC,
            # single-TC chips (v5e/v6e) expose 128 MiB.
            dual_core = vmem_cap <= 80 * 1024 * 1024
    except Exception:
        pass
    return vmem_cap, dual_core


# ---------------------------------------------------------------------------
# Fast path: whole (R, N) slab fits comfortably in VMEM (single block, no grid).
# ---------------------------------------------------------------------------
def _gw_small_kernel(j_ref, o_ref, *, n_rows, n_cols, target):
    x = j_ref[...].astype(jnp.float32)                              # (R, N)
    ch_mean = jnp.sum(x, axis=1, keepdims=True) * (1.0 / float(n_cols))
    d = ch_mean - jnp.float32(target)                               # (R, 1)
    o_ref[...] = jnp.sum(d * d, axis=0, keepdims=True) * (1.0 / float(n_rows))


# ---------------------------------------------------------------------------
# Column-tiled path: tile the spatial (lane) axis; emit per-row partial sums.
#   j_ref    : (R, COL_TILE) native-dtype tile of the (stacked) image
#   part_ref : (1, R, 1) per-parallel-slice partial row sums (f32)
#   acc_ref  : (R, COL_TILE) f32 lane-dense running accumulator
# ---------------------------------------------------------------------------
def _gw_partial_kernel(j_ref, part_ref, acc_ref, *, kt_per, n_cols, col_tile):
    p = pl.program_id(0)   # parallel slice (TensorCore on dual-TC chips)
    k = pl.program_id(1)   # reduction step within the slice

    @pl.when(k == 0)
    def _():
        acc_ref[...] = jnp.zeros_like(acc_ref)

    # Logical (unclamped) column offset of this step; the index_map clamps the
    # DMA'd block, the mask below clamps the arithmetic.
    base = (p * kt_per + k) * col_tile
    x = j_ref[...].astype(jnp.float32)

    # Interior tiles: plain wide VPU add (no mask, no iota).
    @pl.when(base + col_tile <= n_cols)
    def _():
        acc_ref[...] += x

    # Ragged last tile and (at most one) overflow step of the uneven 2-way
    # split: lanes with logical column >= n_cols are masked to zero.
    @pl.when(base + col_tile > n_cols)
    def _():
        col = jax.lax.broadcasted_iota(jnp.int32, x.shape, 1) + base
        acc_ref[...] += jnp.where(col < n_cols, x, 0.0)

    # Single cross-lane reduce per slice, at the end of the k loop.
    @pl.when(k == kt_per - 1)
    def _():
        part_ref[...] = jnp.sum(acc_ref[...], axis=1, keepdims=True)[None]


# ---------------------------------------------------------------------------
# Row-tiled path (degenerate corner: tiny spatial dim / huge channel count).
# ---------------------------------------------------------------------------
def _gw_rowsum_kernel(j_ref, o_ref):
    o_ref[...] = jnp.sum(j_ref[...].astype(jnp.float32), axis=1, keepdims=True)


# ---------------------------------------------------------------------------
# Wrapper
# ---------------------------------------------------------------------------
def gray_world_prior_loss(J, target_intensity=0.5):
    """Pallas implementation of GrayWorldPriorLoss.forward.

    J: (B, C, H, W) or (B, C, L).  Returns a scalar float32 loss.
    """
    if J.ndim == 4:
        B, C, H, W = J.shape
        flat = J.reshape(B * C, H * W)
    elif J.ndim == 3:
        B, C, L = J.shape
        flat = J.reshape(B * C, L)
    else:
        raise AssertionError("J must be 4-D (bchw) or 3-D (bc flat)")

    R0, N0 = flat.shape
    itemsize = jnp.dtype(flat.dtype).itemsize
    target = float(target_intensity)

    # TODO(synk): the PyTorch module's host-side NaN print is omitted (pure
    # side effect; does not change the returned loss).

    vmem_cap, dual_core = _tpu_params()
    vmem_limit = (64 * 1024 * 1024 if vmem_cap >= 120 * 1024 * 1024
                  else 32 * 1024 * 1024)
    tile_budget = vmem_limit // 2
    step_target = (4 if dual_core else 2) * 1024 * 1024   # input bytes / step

    # ---------------- small inputs: single block, no grid ----------------
    if R0 * N0 * itemsize <= _FAST_PATH_BYTES:
        kernel = functools.partial(
            _gw_small_kernel, n_rows=R0, n_cols=N0, target=target)
        out = pl.pallas_call(
            kernel,
            out_shape=jax.ShapeDtypeStruct((1, 1), jnp.float32),
            compiler_params=pltpu.CompilerParams(vmem_limit_bytes=vmem_limit),
            cost_estimate=pl.CostEstimate(
                flops=2 * R0 * N0, transcendentals=0,
                bytes_accessed=R0 * N0 * itemsize + 4),
        )(flat)
        return out[0, 0]

    sub = _sublane_min(itemsize)

    # The column-tiled path needs a reasonable spatial extent and a row count
    # whose minimal (r_pad, 128) double-buffered tile fits the VMEM budget.
    min_tile_bytes = _round_up(R0, sub) * 128 * (2 * itemsize + 4)
    use_column_path = (N0 >= 128) and (min_tile_bytes <= tile_budget)

    if not use_column_path:
        # Degenerate corner: tile the row axis; each row block reduces
        # independently (partial last block's garbage rows are dropped on
        # writeback and never used).
        # TODO(synk): the (huge R AND huge N) case would need 2-D tiling; it
        # is unreachable for realistic GrayWorld inputs.
        row_tile = max(8, min(_round_up(R0, 8), 1024,
                              (tile_budget // max(1, 2 * N0 * itemsize))
                              // 8 * 8))
        row_sums = pl.pallas_call(
            _gw_rowsum_kernel,
            out_shape=jax.ShapeDtypeStruct((R0, 1), jnp.float32),
            grid_spec=pltpu.PrefetchScalarGridSpec(
                num_scalar_prefetch=0,
                grid=(pl.cdiv(R0, row_tile),),
                in_specs=[pl.BlockSpec((row_tile, N0), lambda i: (i, 0))],
                out_specs=pl.BlockSpec((row_tile, 1), lambda i: (i, 0)),
            ),
            compiler_params=pltpu.CompilerParams(
                dimension_semantics=("parallel",),
                vmem_limit_bytes=vmem_limit),
            cost_estimate=pl.CostEstimate(
                flops=R0 * N0, transcendentals=0,
                bytes_accessed=R0 * N0 * itemsize + R0 * 4),
        )(flat)
        ch_mean = row_sums[:, 0] * (1.0 / float(N0))
        diff = ch_mean - jnp.float32(target)
        return jnp.mean(diff * diff)

    # ---------------- column-tiled partial-sum path ----------------
    # Small-R sublane stacking: zero-copy reshape (R0, N0) -> (R0*G, N0/G) so
    # a few-channel image fills the sublane tile; each group of G stacked rows
    # belongs to one original channel and is folded back in the epilogue.
    G = 1
    if R0 % sub != 0:
        g0 = sub // math.gcd(R0, sub)      # smallest G with (R0*G) % sub == 0
        if (N0 % g0 == 0 and N0 // g0 >= 256
                and (R0 * g0) * 128 * (2 * itemsize + 4) <= tile_budget):
            G = g0
    flat2 = flat.reshape(R0 * G, N0 // G) if G > 1 else flat
    R, N = flat2.shape

    r_pad_in = _round_up(R, sub)           # sublane-padded input rows
    r_pad_acc = _round_up(R, 8)            # sublane-padded f32 accumulator rows

    # Column tile: hit the per-step input-bytes target, capped by the
    # sublane-aware VMEM budget (2 input buffers + f32 accumulator), rounded
    # to a multiple of 128 lanes and never wider than the (padded) array.
    ct_target = max(128, (step_target // (r_pad_in * itemsize)) // 128 * 128)
    per_col_vmem = 2 * r_pad_in * itemsize + r_pad_acc * 4
    ct_vmem = max(128, (tile_budget // per_col_vmem) // 128 * 128)
    col_tile = min(ct_target, ct_vmem, _round_up(N, 128))

    total_tiles = pl.cdiv(N, col_tile)
    # Unconditional 2-way TensorCore split on dual-TC chips: cdiv split plus a
    # clamped index_map; the in-kernel mask zeroes the (<=1) overflow step.
    n_par = 2 if (dual_core and total_tiles >= 2) else 1
    kt_per = pl.cdiv(total_tiles, n_par)
    last_tile = total_tiles - 1

    kernel = functools.partial(
        _gw_partial_kernel, kt_per=kt_per, n_cols=N, col_tile=col_tile)

    partial = pl.pallas_call(
        kernel,
        out_shape=jax.ShapeDtypeStruct((n_par, R, 1), jnp.float32),
        grid_spec=pltpu.PrefetchScalarGridSpec(
            num_scalar_prefetch=0,
            grid=(n_par, kt_per),
            in_specs=[pl.BlockSpec(
                (R, col_tile),
                lambda p, k: (0, jnp.minimum(p * kt_per + k, last_tile)))],
            out_specs=pl.BlockSpec((1, R, 1), lambda p, k: (p, 0, 0)),
            scratch_shapes=[pltpu.VMEM((R, col_tile), jnp.float32)],
        ),
        compiler_params=pltpu.CompilerParams(
            dimension_semantics=("parallel", "arbitrary"),
            vmem_limit_bytes=vmem_limit),
        cost_estimate=pl.CostEstimate(
            flops=2 * R * N, transcendentals=0,
            bytes_accessed=R * N * itemsize + n_par * R * 4),
    )(flat2)

    # Tiny epilogue over a few hundred floats: combine TC slices, fold stacked
    # row groups, per-channel mean, MSE against the target.
    row_sum = jnp.sum(partial[..., 0], axis=0)            # (R0*G,)
    if G > 1:
        row_sum = row_sum.reshape(R0, G).sum(axis=1)       # (R0,)
    ch_mean = row_sum * (1.0 / float(N0))
    diff = ch_mean - jnp.float32(target)
    return jnp.mean(diff * diff)


def _reference_loss(J, target_intensity=0.5):
    if J.ndim == 4:
        ch = jnp.mean(J, axis=(-2, -1), keepdims=True)
    else:
        ch = jnp.mean(J, axis=-1)
    return jnp.mean((ch - target_intensity) ** 2)


if __name__ == "__main__":
    root = jax.random.PRNGKey(0)
    k0, k1, k2, k3, k4 = jax.random.split(root, 5)

    # Small NCHW input (fast path) — the canonical module shape.
    x = jax.random.uniform(k0, (2, 4, 16, 16), dtype=jnp.float32)
    loss = jax.block_until_ready(gray_world_prior_loss(x, 0.5))
    ref = _reference_loss(x, 0.5)
    assert jnp.allclose(loss, ref, atol=1e-6, rtol=1e-5), (loss, ref)

    # 3-D (b, c, flat) path (fast path).
    x3 = jax.random.uniform(k1, (2, 4, 256), dtype=jnp.float32)
    loss3 = jax.block_until_ready(gray_world_prior_loss(x3, 0.5))
    ref3 = _reference_loss(x3, 0.5)
    assert jnp.allclose(loss3, ref3, atol=1e-6, rtol=1e-5), (loss3, ref3)

    # Column-tiled path: f32, sublane stacking (R0=6 -> 24), ragged last tile,
    # and the dual-TC split when running on a dual-core chip.
    xp = jax.random.uniform(k2, (2, 3, 512, 700), dtype=jnp.float32)
    lossp = jax.block_until_ready(gray_world_prior_loss(xp, 0.2))
    refp = _reference_loss(xp, 0.2)
    assert jnp.allclose(lossp, refp, atol=1e-5, rtol=1e-4), (lossp, refp)

    # Column-tiled path with native bf16 reads and 16-row sublane stacking.
    xb = jax.random.uniform(k3, (2, 3, 768, 700),
                            dtype=jnp.float32).astype(jnp.bfloat16)
    lossb = jax.block_until_ready(gray_world_prior_loss(xb, 0.1))
    refb = _reference_loss(xb.astype(jnp.float32), 0.1)
    assert jnp.allclose(lossb, refb, atol=1e-4, rtol=1e-3), (lossb, refb)

    # Row-tiled degenerate corner: tiny spatial dim, many channels.
    xr = jax.random.uniform(k4, (64, 256, 9, 9), dtype=jnp.float32)
    lossr = jax.block_until_ready(gray_world_prior_loss(xr, 0.5))
    refr = _reference_loss(xr, 0.5)
    assert jnp.allclose(lossr, refr, atol=1e-6, rtol=1e-5), (lossr, refr)

    print("KERNEL_OK")
</pallas_src>

<mosaic_0001>
module attributes {stable_mosaic.version = 11 : i64} {
  func.func @_gw_small_kernel(%arg0: memref<8x256xf32, #tpu.memory_space<vmem>>, %arg1: memref<1x1xf32, #tpu.memory_space<vmem>>) attributes {dimension_semantics = [], scalar_prefetch = 0 : i64, scratch_operands = 0 : i64, tpu.core_type = #tpu.core_type<tc>} {
    %c0 = arith.constant 0 : index
    %c0_0 = arith.constant 0 : index
    %0 = vector.load %arg0[%c0, %c0_0] : memref<8x256xf32, #tpu.memory_space<vmem>>, vector<8x256xf32>
    %cst = arith.constant dense<0.000000e+00> : vector<8xf32>
    %1 = vector.multi_reduction <add>, %0, %cst [1] : vector<8x256xf32> to vector<8xf32>
    %2 = vector.shape_cast %1 : vector<8xf32> to vector<8x1xf32>
    %cst_1 = arith.constant 3.906250e-03 : f32
    %3 = vector.broadcast %cst_1 : f32 to vector<8x1xf32>
    %4 = arith.mulf %2, %3 : vector<8x1xf32>
    %cst_2 = arith.constant 5.000000e-01 : f32
    %5 = vector.broadcast %cst_2 : f32 to vector<8x1xf32>
    %6 = arith.subf %4, %5 : vector<8x1xf32>
    %7 = arith.mulf %6, %6 : vector<8x1xf32>
    %cst_3 = arith.constant dense<0.000000e+00> : vector<1xf32>
    %8 = vector.multi_reduction <add>, %7, %cst_3 [0] : vector<8x1xf32> to vector<1xf32>
    %9 = vector.shape_cast %8 : vector<1xf32> to vector<1x1xf32>
    %cst_4 = arith.constant 1.250000e-01 : f32
    %10 = vector.broadcast %cst_4 : f32 to vector<1x1xf32>
    %11 = arith.mulf %9, %10 : vector<1x1xf32>
    %c0_5 = arith.constant 0 : index
    %c0_6 = arith.constant 0 : index
    %12 = vector.load %arg1[%c0_5, %c0_6] : memref<1x1xf32, #tpu.memory_space<vmem>>, vector<1x1xf32>
    tpu.vector_store %arg1[%c0_5, %c0_6], %11 {strides = array<i32>} : memref<1x1xf32, #tpu.memory_space<vmem>>, vector<1x1xf32>,
    return
  }
}

</mosaic_0001>

<llo_original>
// kernel: tpu_custom_call.1
$region0: #{tpu_custom_call.1}
  #allocation0 [shape = 'u32[]', space=smem, size = 0x4, offset = 0x4, fixed_abs, tag = 'smem constant byte address 0x4 - core index']
  #allocation1 [shape = 'u32[144,128]{1,0:T(1,128)}', space=vmem, size = 0x12000, scoped, tag = 'internal scratch']
  %s0 = inlined_call_operand.hbm [shape: f32[8,256], index: 0, kind: input, shape index: {}]
  %s1 = inlined_call_operand.hbm [shape: f32[1,1], index: 1, kind: output, shape index: {}]
  %s2 = sld [smem:[#allocation0]]
  $region18: #{tpu_custom_call.1} parent=0
    _
  %s4 = ssub.s32 1, %s2
  %s5 = scalar_select 0, %s4, %s2
  $region1: #{tpu_custom_call.1} parent=0
    #allocation2 [shape = 'u8[8192]{0}', space=vmem, size = 0x2000, scoped, tag = 'input window, operand 0, single buffered']
    #allocation3 [shape = 's32[1]{0}', space=sflag, size = 0x4, scoped, tag = 'scoped memory for tpu_custom_call.1']
    #allocation4 [shape = 's32[1]{0}', space=sflag, size = 0x4, scoped, tag = 'scoped memory for tpu_custom_call.1']
    #allocation5 [shape = 'u8[512]{0}', space=vmem, size = 0x400, scoped, tag = 'output window, operand 0, single buffered']
    %6 = vsyncpa [#allocation3], 0
    %7 = vsyncpa [#allocation4], 0
    // Predicated region
    $region2: #{tpu_custom_call.1} parent=1 // pred_check
      _
    $region3: #{tpu_custom_call.1} parent=1 // pred_check_branch
      %9 = sbr.rel (0) target = $region5
    $region4: #{tpu_custom_call.1} parent=1 // pred_region
      %s11 = ssub.s32 256, 256
      %12 = vsyncadd [#allocation3], %s11
      %s14 = sshll.u32 [#allocation2], 4
      %s15 = int_to_ptr.vmem [resolvable:$true] %s14
      %17 = dma.hbm_to_vmem [thread:$0]  %s0, 256, %s15, [#allocation3]
    $region5: #{tpu_custom_call.1} parent=1 // pred_fallthru
      _
    // Predicated region
    $region6: #{tpu_custom_call.1} parent=1 // pred_check
      _
    $region7: #{tpu_custom_call.1} parent=1 // pred_check_branch
      %19 = sbr.rel (0) target = $region9
    $region8: #{tpu_custom_call.1} parent=1 // pred_region
      %20 = dma.done [#allocation3], 256
    $region9: #{tpu_custom_call.1} parent=1 // pred_fallthru
      _
    %v21 = vld [vmem:[#allocation2] sm:$0xff]
    %v22 = vld [vmem:[#allocation2 + $0x8] sm:$0xff]
    %v23 = vadd.f32 %v21, %v22
    %24 = vadd.xlane.f32.xlu0 %v23
    %v25 = vpop.xlane.xlu0 %24
    %v26 = vmul.f32 %v25, 0.00390625
    %v27 = vsub.f32 %v26, 0.5
    %v28 = vmul.f32 %v27, %v27
    %v29 = vrot.slane %v28, 4
    %v30 = vadd.f32 %v28, %v29
    %v31 = vrot.slane %v30, 2
    %v32 = vadd.f32 %v30, %v31
    %v33 = vrot.slane %v32, 1
    %v34 = vadd.f32 %v32, %v33
    %v35 = vmul.f32 %v34, 0.125
    %vm36 = vcmask 0
    %37 = vst.msk [vmem:[#allocation5] sm:$0x1] %vm36, %v35
    // Predicated region
    $region10: #{tpu_custom_call.1} parent=1 // pred_check
      _
    $region11: #{tpu_custom_call.1} parent=1 // pred_check_branch
      %39 = sbr.rel (0) target = $region13
    $region12: #{tpu_custom_call.1} parent=1 // pred_region
      %s41 = ssub.s32 16, 16
      %42 = vsyncadd [#allocation4], %s41
      %s44 = sshll.u32 [#allocation5], 4
      %s45 = int_to_ptr.vmem [resolvable:$true] %s44
      %47 = dma.vmem_to_hbm [thread:$0]  %s45, 16, %s1, [#allocation4]
    $region13: #{tpu_custom_call.1} parent=1 // pred_fallthru
      _
    // Predicated region
    $region14: #{tpu_custom_call.1} parent=1 // pred_check
      _
    $region15: #{tpu_custom_call.1} parent=1 // pred_check_branch
      %49 = sbr.rel (0) target = $region17
    $region16: #{tpu_custom_call.1} parent=1 // pred_region
      %50 = dma.done [#allocation4], 16
    $region17: #{tpu_custom_call.1} parent=1 // pred_fallthru
      _
    %51 = vsyncpa [#allocation3], 1
    %52 = vsyncpa [#allocation4], 1

</llo_original>
